<compile_context>
chip_gen: v5e
topology: v5e:2x2
jax: 0.10.0
libtpu: 0.0.40
codegen_flags: <defaults>
</compile_context>

<pallas_src>
import jax
import jax.numpy as jnp
from jax.experimental import pallas as pl
from jax.experimental.pallas import tpu as pltpu


# ---------------------------------------------------------------------------
# Fused SwiGLU kernel: one (TM, D) row tile x one F-tile per grid step.
# ---------------------------------------------------------------------------
def _swiglu_kernel(x_ref, w13_ref, w2_ref, o_ref, acc_ref):
    k = pl.program_id(1)

    @pl.when(k == 0)
    def _init():
        acc_ref[...] = jnp.zeros_like(acc_ref)

    x = x_ref[...]                                                     # (TM, D)

    # One wide up-projection on the MXU: [h1_k | h3_k] in fp32.
    h = jnp.dot(x, w13_ref[...], preferred_element_type=jnp.float32)  # (TM, 2*TF)
    tf = w2_ref.shape[0]
    h1 = h[:, :tf]
    h3 = h[:, tf:]

    # SiLU gate in fp32 (EUP sigmoid + VPU muls), back to the matmul dtype.
    g = (h1 * jax.nn.sigmoid(h1)) * h3                                 # (TM, TF) f32
    g = g.astype(w2_ref.dtype)

    # Down-projection partial sum, fp32 accumulation across F tiles.
    acc_ref[...] += jnp.dot(g, w2_ref[...], preferred_element_type=jnp.float32)

    @pl.when(k == pl.num_programs(1) - 1)
    def _store():
        o_ref[...] = acc_ref[...].astype(o_ref.dtype)


def swiglu_ffn(x, w1, w3, w2, *, tm=None, tf=None, compute_dtype=None):
    """x: (..., D) -> (..., D). Weights: w1/w3 (D, F), w2 (F, D).

    compute_dtype: optionally cast x and all weights (e.g. to bf16) for
    MXU-rate matmuls; accumulation stays fp32, output keeps x's dtype.
    """
    orig_shape = x.shape
    out_dtype = x.dtype
    D = orig_shape[-1]
    F = w1.shape[1]
    assert w1.shape == (D, F) and w3.shape == (D, F) and w2.shape == (F, D)

    x2 = x.reshape(-1, D)
    M = x2.shape[0]

    if compute_dtype is not None:
        x2 = x2.astype(compute_dtype)
        w1 = w1.astype(compute_dtype)
        w3 = w3.astype(compute_dtype)
        w2 = w2.astype(compute_dtype)

    # ---- Row tile: MXU-aligned, capped at 512; pad M instead of tm=M. ----
    if tm is None:
        if M >= 512:
            tm = 512
        elif M >= 256:
            tm = 256
        else:
            tm = max(8, ((M + 7) // 8) * 8)   # small-M (decode) path
    tm = int(tm)
    Mp = ((M + tm - 1) // tm) * tm
    if Mp != M:
        x2 = jnp.pad(x2, ((0, Mp - M), (0, 0)))

    # ---- Hidden-dim (F) tile: <=512 keeps double-buffering within v7x VMEM. ----
    if tf is None:
        tf = F
        for cand in (512, 256, 128):
            if F % cand == 0:
                tf = cand
                break
    tf = int(tf)
    assert F % tf == 0, f"hidden dim {F} must be divisible by tf={tf}"
    kt = F // tf

    # Fused up/gate weights: per-F-tile layout [W1_k | W3_k] -> (D, kt*2*tf).
    w13 = jnp.concatenate(
        [w1.reshape(D, kt, tf), w3.reshape(D, kt, tf)], axis=2
    ).reshape(D, kt * 2 * tf)

    # ---- VMEM budget from the actual (double-buffered) tile footprint. ----
    xi = jnp.dtype(x2.dtype).itemsize
    wi = jnp.dtype(w13.dtype).itemsize
    oi = jnp.dtype(out_dtype).itemsize
    footprint = (
        2 * (tm * D * xi            # x tile
             + D * 2 * tf * wi      # fused w13 tile
             + tf * D * wi          # w2 tile
             + tm * D * oi)         # output tile
        + tm * D * 4                # fp32 accumulator scratch
    )
    vmem_limit = min(64 << 20, max(32 << 20, int(1.5 * footprint)))

    out2 = pl.pallas_call(
        _swiglu_kernel,
        out_shape=jax.ShapeDtypeStruct((Mp, D), out_dtype),
        grid=(Mp // tm, kt),
        in_specs=[
            pl.BlockSpec((tm, D), lambda i, k: (i, 0)),        # x tile (constant over k)
            pl.BlockSpec((D, 2 * tf), lambda i, k: (0, k)),    # streamed [W1_k | W3_k]
            pl.BlockSpec((tf, D), lambda i, k: (k, 0)),        # streamed W2_k
        ],
        out_specs=pl.BlockSpec((tm, D), lambda i, k: (i, 0)),
        scratch_shapes=[pltpu.VMEM((tm, D), jnp.float32)],
        compiler_params=pltpu.CompilerParams(
            dimension_semantics=("parallel", "arbitrary"),
            vmem_limit_bytes=vmem_limit,
        ),
    )(x2, w13, w2)

    if Mp != M:
        out2 = out2[:M]
    return out2.reshape(orig_shape)


# ---------------------------------------------------------------------------
# Pure-JAX reference (mirrors PyTorch SwiGLUFeedForward.forward).
# ---------------------------------------------------------------------------
def swiglu_ref(x, w1, w3, w2):
    h1 = x @ w1
    h3 = x @ w3
    return (jax.nn.silu(h1) * h3) @ w2


def _llama_hidden_dim(hidden_dim, multiple_of):
    hd = int(2 * hidden_dim / 3)
    return multiple_of * ((hd + multiple_of - 1) // multiple_of)


if __name__ == "__main__":
    key = jax.random.PRNGKey(0)

    # --- Config A: small spec shapes (batch=2, seq=8, dim=32, hidden=64). ---
    B, N, dim = 2, 8, 32
    F = _llama_hidden_dim(64, 32)                     # -> 64
    kx, k1, k2, k3, key = jax.random.split(key, 5)
    x  = jax.random.normal(kx, (B, N, dim), dtype=jnp.float32)
    w1 = 0.05 * jax.random.normal(k1, (dim, F), dtype=jnp.float32)
    w3 = 0.05 * jax.random.normal(k2, (dim, F), dtype=jnp.float32)
    w2 = 0.05 * jax.random.normal(k3, (F, dim), dtype=jnp.float32)

    out = jax.block_until_ready(swiglu_ffn(x, w1, w3, w2, tm=8))
    ref = swiglu_ref(x, w1, w3, w2)
    assert out.shape == (B, N, dim)
    assert jnp.allclose(out, ref, atol=1e-5, rtol=1e-5)

    # --- Config B: exercises F-tiling (kt=2), row padding, lane-dense D=128. ---
    B2, N2, dim2 = 2, 12, 128                         # M=24 -> padded to 32 at tm=16
    F2 = _llama_hidden_dim(384, 32)                   # -> 256
    kx, k1, k2, k3, key = jax.random.split(key, 5)
    x_b  = jax.random.normal(kx, (B2, N2, dim2), dtype=jnp.float32)
    w1_b = 0.05 * jax.random.normal(k1, (dim2, F2), dtype=jnp.float32)
    w3_b = 0.05 * jax.random.normal(k2, (dim2, F2), dtype=jnp.float32)
    w2_b = 0.05 * jax.random.normal(k3, (F2, dim2), dtype=jnp.float32)

    out_b = jax.block_until_ready(swiglu_ffn(x_b, w1_b, w3_b, w2_b, tm=16, tf=128))
    ref_b = swiglu_ref(x_b, w1_b, w3_b, w2_b)
    assert out_b.shape == (B2, N2, dim2)
    assert jnp.allclose(out_b, ref_b, atol=1e-5, rtol=1e-5)

    # --- Config C: bf16 operand path (MXU-rate dtype), smoke test. ---
    out_bf16 = jax.block_until_ready(
        swiglu_ffn(x_b.astype(jnp.bfloat16), w1_b.astype(jnp.bfloat16),
                   w3_b.astype(jnp.bfloat16), w2_b.astype(jnp.bfloat16),
                   tm=16, tf=128))
    assert out_bf16.shape == (B2, N2, dim2)
    assert out_bf16.dtype == jnp.bfloat16
    assert bool(jnp.isfinite(out_bf16.astype(jnp.float32)).all())

    print("KERNEL_OK")
</pallas_src>

<mosaic_0001>
module attributes {stable_mosaic.version = 11 : i64} {
  func.func @_swiglu_kernel(%arg0: i32, %arg1: i32, %arg2: memref<8x32xf32, #tpu.memory_space<vmem>>, %arg3: memref<32x128xf32, #tpu.memory_space<vmem>>, %arg4: memref<64x32xf32, #tpu.memory_space<vmem>>, %arg5: memref<8x32xf32, #tpu.memory_space<vmem>>, %arg6: memref<8x32xf32, #tpu.memory_space<vmem>>) attributes {dimension_semantics = [#tpu.dimension_semantics<parallel>, #tpu.dimension_semantics<arbitrary>], iteration_bounds = array<i64: 2, 1>, scalar_prefetch = 0 : i64, scratch_operands = 1 : i64, tpu.core_type = #tpu.core_type<tc>, window_params = [{transform_indices = @transform_0, window_bounds = array<i64: 8, 32>}, {transform_indices = @transform_1, window_bounds = array<i64: 32, 128>}, {transform_indices = @transform_2, window_bounds = array<i64: 64, 32>}, {transform_indices = @transform_3, window_bounds = array<i64: 8, 32>}]} {
    %c0_i32 = arith.constant 0 : i32
    %0 = arith.cmpi eq, %arg1, %c0_i32 : i32
    %1 = arith.extui %0 : i1 to i32
    %c0_i32_0 = arith.constant 0 : i32
    %2 = arith.cmpi ne, %1, %c0_i32_0 : i32
    scf.if %2 {
      %cst_14 = arith.constant 0.000000e+00 : f32
      %23 = vector.broadcast %cst_14 : f32 to vector<8x32xf32>
      %c0_15 = arith.constant 0 : index
      %c0_16 = arith.constant 0 : index
      %24 = vector.load %arg6[%c0_15, %c0_16] : memref<8x32xf32, #tpu.memory_space<vmem>>, vector<8x32xf32>
      tpu.vector_store %arg6[%c0_15, %c0_16], %23 {strides = array<i32>} : memref<8x32xf32, #tpu.memory_space<vmem>>, vector<8x32xf32>,
    } else {
    }
    %c0 = arith.constant 0 : index
    %c0_1 = arith.constant 0 : index
    %3 = vector.load %arg2[%c0, %c0_1] : memref<8x32xf32, #tpu.memory_space<vmem>>, vector<8x32xf32>
    %c0_2 = arith.constant 0 : index
    %c0_3 = arith.constant 0 : index
    %4 = vector.load %arg3[%c0_2, %c0_3] : memref<32x128xf32, #tpu.memory_space<vmem>>, vector<32x128xf32>
    %cst = arith.constant dense<0.000000e+00> : vector<8x128xf32>
    %5 = tpu.matmul %3, %4, %cst {dimension_numbers = #tpu.dot_dimension_numbers<[1], [0], [0], [1], [0, 0, 1, 1], [], []>} : vector<8x32xf32>, vector<32x128xf32>, vector<8x128xf32> -> vector<8x128xf32>
    %6 = vector.extract_strided_slice %5 {offsets = [0, 0], sizes = [8, 64], strides = [1, 1]} : vector<8x128xf32> to vector<8x64xf32>
    %7 = vector.extract_strided_slice %5 {offsets = [0, 64], sizes = [8, 64], strides = [1, 1]} : vector<8x128xf32> to vector<8x64xf32>
    %8 = arith.negf %6 : vector<8x64xf32>
    %9 = math.exp %8 : vector<8x64xf32>
    %cst_4 = arith.constant 1.000000e+00 : f32
    %10 = vector.broadcast %cst_4 : f32 to vector<8x64xf32>
    %11 = arith.addf %10, %9 : vector<8x64xf32>
    %12 = arith.divf %10, %11 : vector<8x64xf32>
    %13 = arith.mulf %6, %12 : vector<8x64xf32>
    %14 = arith.mulf %13, %7 : vector<8x64xf32>
    %c0_5 = arith.constant 0 : index
    %c0_6 = arith.constant 0 : index
    %15 = vector.load %arg6[%c0_5, %c0_6] : memref<8x32xf32, #tpu.memory_space<vmem>>, vector<8x32xf32>
    %c0_7 = arith.constant 0 : index
    %c0_8 = arith.constant 0 : index
    %16 = vector.load %arg4[%c0_7, %c0_8] : memref<64x32xf32, #tpu.memory_space<vmem>>, vector<64x32xf32>
    %cst_9 = arith.constant dense<0.000000e+00> : vector<8x32xf32>
    %17 = tpu.matmul %14, %16, %cst_9 {dimension_numbers = #tpu.dot_dimension_numbers<[1], [0], [0], [1], [0, 0, 1, 1], [], []>} : vector<8x64xf32>, vector<64x32xf32>, vector<8x32xf32> -> vector<8x32xf32>
    %18 = arith.addf %15, %17 : vector<8x32xf32>
    %c0_10 = arith.constant 0 : index
    %c0_11 = arith.constant 0 : index
    %19 = vector.load %arg6[%c0_10, %c0_11] : memref<8x32xf32, #tpu.memory_space<vmem>>, vector<8x32xf32>
    tpu.vector_store %arg6[%c0_10, %c0_11], %18 {strides = array<i32>} : memref<8x32xf32, #tpu.memory_space<vmem>>, vector<8x32xf32>,
    %c0_i32_12 = arith.constant 0 : i32
    %20 = arith.cmpi eq, %arg1, %c0_i32_12 : i32
    %21 = arith.extui %20 : i1 to i32
    %c0_i32_13 = arith.constant 0 : i32
    %22 = arith.cmpi ne, %21, %c0_i32_13 : i32
    scf.if %22 {
      %c0_14 = arith.constant 0 : index
      %c0_15 = arith.constant 0 : index
      %23 = vector.load %arg6[%c0_14, %c0_15] : memref<8x32xf32, #tpu.memory_space<vmem>>, vector<8x32xf32>
      %c0_16 = arith.constant 0 : index
      %c0_17 = arith.constant 0 : index
      %24 = vector.load %arg5[%c0_16, %c0_17] : memref<8x32xf32, #tpu.memory_space<vmem>>, vector<8x32xf32>
      tpu.vector_store %arg5[%c0_16, %c0_17], %23 {strides = array<i32>} : memref<8x32xf32, #tpu.memory_space<vmem>>, vector<8x32xf32>,
    } else {
    }
    return
  }
  func.func @transform_0(%arg0: i32, %arg1: i32) -> (i32, i32) {
    %c0_i32 = arith.constant 0 : i32
    %c0_i32_0 = arith.constant 0 : i32
    return %arg0, %c0_i32 : i32, i32
  }
  func.func @transform_1(%arg0: i32, %arg1: i32) -> (i32, i32) {
    %c0_i32 = arith.constant 0 : i32
    %c0_i32_0 = arith.constant 0 : i32
    return %c0_i32, %arg1 : i32, i32
  }
  func.func @transform_2(%arg0: i32, %arg1: i32) -> (i32, i32) {
    %c0_i32 = arith.constant 0 : i32
    %c0_i32_0 = arith.constant 0 : i32
    return %arg1, %c0_i32 : i32, i32
  }
  func.func @transform_3(%arg0: i32, %arg1: i32) -> (i32, i32) {
    %c0_i32 = arith.constant 0 : i32
    %c0_i32_0 = arith.constant 0 : i32
    return %arg0, %c0_i32 : i32, i32
  }
}

</mosaic_0001>

<llo_original>
// kernel: tpu_custom_call.1
$region0: #{tpu_custom_call.1}
  #allocation0 [shape = 'u32[]', space=smem, size = 0x4, offset = 0x4, fixed_abs, tag = 'smem constant byte address 0x4 - core index']
  #allocation1 [shape = 'u32[72,128]{1,0:T(1,128)}', space=vmem, size = 0x9000, scoped, tag = 'internal scratch']
  #allocation2 [shape = 'f32[8,32]{1,0:T(8,128)}', space=vmem, size = 0x1000, scoped, tag = 'scratch operand']
  %s0 = inlined_call_operand.vmem [shape: f32[16,32], index: 0, kind: input, shape index: {}]
  %s1 = inlined_call_operand.vmem [shape: f32[32,128], index: 1, kind: input, shape index: {}]
  %s2 = inlined_call_operand.vmem [shape: f32[64,32], index: 2, kind: input, shape index: {}]
  %s3 = inlined_call_operand.hbm [shape: f32[16,32], index: 3, kind: output, shape index: {}]
  %s4 = sld [smem:[#allocation0]]
  $region53: #{tpu_custom_call.1} parent=0
    _
  %s6 = ssub.s32 1, %s4
  %s7 = scalar_select 0, %s6, %s4
  $region1: #{tpu_custom_call.1} parent=0
    #allocation3 [shape = 'u8[8192]{0}', space=vmem, size = 0x2000, scoped, tag = 'output window, operand 0']
    #allocation4 [shape = 's32[2]{0}', space=sflag, size = 0x8, scoped, tag = 'scoped memory for tpu_custom_call.1']
    %8 = vsyncpa [#allocation4], 0
    %s9 = scalar_lea.sflag [#allocation4], 1
    %10 = vsyncpa %s9, 0
    loop: start=0, step=1, limit=4
    $region2: #{tpu_custom_call.1} parent=1 // loop_pre_header
      _
    $region3: #{tpu_custom_call.1} parent=1 // loop_header
      %s12 = sphi 0, %s16
      %p13 = scmp.ge.s32.totalorder %s12, 4
      %s19 = sphi 0, %s31
      %s20 = sphi 0, %s27
      %s21 = sphi 0, %s19
      %s22 = sphi 0, %s20
      %s23 = sphi 0, %s21
      %s24 = sphi 0, %s22
      %s34 = sphi 0, %s36
      %s37 = sphi 0, %s34
      %s38 = sphi 0, %s37
      %s54 = sphi 0, %s38
      %s60 = sphi 0, %s62
      %s63 = sphi 0, %s60
      %s64 = sphi 0, %s63
      %s80 = sphi 0, %s64
      %s86 = sphi 0, %s88
      %s89 = sphi 0, %s86
      %s90 = sphi 0, %s89
      %s106 = sphi 0, %s90
      %s112 = sphi 0, %s114
      %s115 = sphi 0, %s112
      %s116 = sphi 0, %s115
      %s132 = sphi 0, %s116
    $region4: #{tpu_custom_call.1} parent=1 // loop_header_branch
      %15 = sbr.rel (%p13) target = $region8
    $region5: #{tpu_custom_call.1} parent=1 // loop_body
      %s17 = ssub.s32 %s12, 1
      %s18 = ssub.s32 %s12, 2
      %s25 = sadd.s32 1, %s20
      %p26 = scmp.ge.s32.totalorder %s25, 1
      %s27 = scalar_select %p26, 0, %s25
      %s28 = sadd.s32 1, %s19
      %s29 = scalar_select %p26, %s28, %s19
      %p30 = scmp.ge.s32.totalorder %s29, 2
      %s31 = scalar_select %p30, 0, %s29
      %s32 = ssub.s32 %s19, %s31
      %p33 = scmp.eq.s32.totalorder %s32, 0
      %s35 = sadd.s32 %s34, 1
      %s36 = scalar_select %p33, %s34, %s35
      %p39 = pneg %p33
      %p40 = scmp.eq.s32.totalorder %s12, 1
      %p41 = por %p39, %p40
      %p42 = scmp.ne.s32.totalorder %s34, %s37
      %p43 = scmp.eq.s32.totalorder %s12, 0
      %p44 = por %p42, %p43
      %p45 = scmp.ne.s32.totalorder %s34, %s37
      %p46 = scmp.eq.s32.totalorder %s17, 1
      %p47 = por %p45, %p46
      %p48 = scmp.ne.s32.totalorder %s37, %s38
      %p49 = scmp.eq.s32.totalorder %s17, 0
      %p50 = por %p48, %p49
      %p51 = scmp.ne.s32.totalorder %s37, %s38
      %p52 = scmp.eq.s32.totalorder %s18, 1
      %p53 = por %p51, %p52
      %p55 = scmp.ne.s32.totalorder %s38, %s54
      %p56 = scmp.eq.s32.totalorder %s18, 0
      %p57 = por %p55, %p56
      %s58 = ssub.s32 %s20, %s27
      %p59 = scmp.eq.s32.totalorder %s58, 0
      %s61 = sadd.s32 %s60, 1
      %s62 = scalar_select %p59, %s60, %s61
      %p65 = pneg %p59
      %p66 = scmp.eq.s32.totalorder %s12, 1
      %p67 = por %p65, %p66
      %p68 = scmp.ne.s32.totalorder %s60, %s63
      %p69 = scmp.eq.s32.totalorder %s12, 0
      %p70 = por %p68, %p69
      %p71 = scmp.ne.s32.totalorder %s60, %s63
      %p72 = scmp.eq.s32.totalorder %s17, 1
      %p73 = por %p71, %p72
      %p74 = scmp.ne.s32.totalorder %s63, %s64
      %p75 = scmp.eq.s32.totalorder %s17, 0
      %p76 = por %p74, %p75
      %p77 = scmp.ne.s32.totalorder %s63, %s64
      %p78 = scmp.eq.s32.totalorder %s18, 1
      %p79 = por %p77, %p78
      %p81 = scmp.ne.s32.totalorder %s64, %s80
      %p82 = scmp.eq.s32.totalorder %s18, 0
      %p83 = por %p81, %p82
      %s84 = ssub.s32 %s20, %s27
      %p85 = scmp.eq.s32.totalorder %s84, 0
      %s87 = sadd.s32 %s86, 1
      %s88 = scalar_select %p85, %s86, %s87
      %p91 = pneg %p85
      %p92 = scmp.eq.s32.totalorder %s12, 1
      %p93 = por %p91, %p92
      %p94 = scmp.ne.s32.totalorder %s86, %s89
      %p95 = scmp.eq.s32.totalorder %s12, 0
      %p96 = por %p94, %p95
      %p97 = scmp.ne.s32.totalorder %s86, %s89
      %p98 = scmp.eq.s32.totalorder %s17, 1
      %p99 = por %p97, %p98
      %p100 = scmp.ne.s32.totalorder %s89, %s90
      %p101 = scmp.eq.s32.totalorder %s17, 0
      %p102 = por %p100, %p101
      %p103 = scmp.ne.s32.totalorder %s89, %s90
      %p104 = scmp.eq.s32.totalorder %s18, 1
      %p105 = por %p103, %p104
      %p107 = scmp.ne.s32.totalorder %s90, %s106
      %p108 = scmp.eq.s32.totalorder %s18, 0
      %p109 = por %p107, %p108
      %s110 = ssub.s32 %s19, %s31
      %p111 = scmp.eq.s32.totalorder %s110, 0
      %s113 = sadd.s32 %s112, 1
      %s114 = scalar_select %p111, %s112, %s113
      %p117 = pneg %p111
      %p118 = scmp.eq.s32.totalorder %s12, 1
      %p119 = por %p117, %p118
      %p120 = scmp.ne.s32.totalorder %s112, %s115
      %p121 = scmp.eq.s32.totalorder %s12, 0
      %p122 = por %p120, %p121
      %p123 = scmp.ne.s32.totalorder %s112, %s115
      %p124 = scmp.eq.s32.totalorder %s17, 1
      %p125 = por %p123, %p124
      %p126 = scmp.ne.s32.totalorder %s115, %s116
      %p127 = scmp.eq.s32.totalorder %s17, 0
      %p128 = por %p126, %p127
      %p129 = scmp.ne.s32.totalorder %s115, %s116
      %p130 = scmp.eq.s32.totalorder %s18, 1
      %p131 = por %p129, %p130
      %p133 = scmp.ne.s32.totalorder %s116, %s132
      %p134 = scmp.eq.s32.totalorder %s18, 0
      %p135 = por %p133, %p134
      %p136 = scmp.le.s32.totalorder 1, %s12
      %p137 = scmp.lt.s32.totalorder %s12, 3
      %p138 = pnand %p136, %p137
      %p139 = pneg %p138
      // Predicated region
      $region9: #{tpu_custom_call.1} parent=5 // pred_check
        _
      $region10: #{tpu_custom_call.1} parent=5 // pred_check_branch
        %141 = sbr.rel (%p138) target = $region12
      $region11: #{tpu_custom_call.1} parent=5 // pred_region
        %s142 = ssub.s32 %s12, 1
        // Predicated region
        $region13: #{tpu_custom_call.1} parent=11 // pred_check
          %p143 = pneg %p76
        $region14: #{tpu_custom_call.1} parent=11 // pred_check_branch
          %145 = sbr.rel (%p143) target = $region16
        $region15: #{tpu_custom_call.1} parent=11 // pred_region
          %p146 = scmp.lt.s32.totalorder %s22, 0
          %s147 = scalar_select %p146, %s22, 0
          %s148 = smul.addr %s147, 8
          %s149 = scalar_lea.vmem %s1, %s148
        $region16: #{tpu_custom_call.1} parent=11 // pred_fallthru
          _
        // Predicated region
        $region17: #{tpu_custom_call.1} parent=11 // pred_check
          %p150 = pneg %p102
        $region18: #{tpu_custom_call.1} parent=11 // pred_check_branch
          %152 = sbr.rel (%p150) target = $region20
        $region19: #{tpu_custom_call.1} parent=11 // pred_region
          %s153 = smul.u32 8, %s22
          %p154 = scmp.lt.s32.totalorder %s153, 7
          %s155 = scalar_select %p154, %s153, 7
          %s156 = smul.addr %s155, 8
          %s157 = scalar_lea.vmem %s2, %s156
          %s158 = smul.u32 8, %s22
        $region20: #{tpu_custom_call.1} parent=11 // pred_fallthru
          _
      $region12: #{tpu_custom_call.1} parent=5 // pred_fallthru
        _
      %p159 = scmp.lt.s32.totalorder %s12, 2
      // Predicated region
      $region21: #{tpu_custom_call.1} parent=5 // pred_check
        %p160 = pneg %p159
      $region22: #{tpu_custom_call.1} parent=5 // pred_check_branch
        %162 = sbr.rel (%p160) target = $region24
      $region23: #{tpu_custom_call.1} parent=5 // pred_region
        // Predicated region
        $region25: #{tpu_custom_call.1} parent=23 // pred_check
          %p163 = pneg %p44
        $region26: #{tpu_custom_call.1} parent=23 // pred_check_branch
          %165 = sbr.rel (%p163) target = $region28
        $region27: #{tpu_custom_call.1} parent=23 // pred_region
          %p166 = scmp.lt.s32.totalorder %s19, 1
          %s167 = scalar_select %p166, %s19, 1
          %s168 = smul.addr %s167, 8
          %s169 = scalar_lea.vmem %s0, %s168
        $region28: #{tpu_custom_call.1} parent=23 // pred_fallthru
          _
      $region24: #{tpu_custom_call.1} parent=5 // pred_fallthru
        _
      %p170 = scmp.le.s32.totalorder 1, %s12
      %p171 = scmp.lt.s32.totalorder %s12, 3
      %p172 = pnand %p170, %p171
      %p173 = pneg %p172
      // Predicated region
      $region29: #{tpu_custom_call.1} parent=5 // pred_check
        _
      $region30: #{tpu_custom_call.1} parent=5 // pred_check_branch
        %175 = sbr.rel (%p172) target = $region32
      $region31: #{tpu_custom_call.1} parent=5 // pred_region
        %s176 = ssub.s32 %s12, 1
        %p177 = scmp.lt.s32.totalorder %s21, 1
        %s178 = scalar_select %p177, %s21, 1
        %s179 = smul.addr %s178, 8
        %s180 = scalar_lea.vmem %s0, %s179
        %p181 = pneg %p50
        %p182 = pneg %p47
        %p183 = scmp.lt.s32.totalorder %s22, 0
        %s184 = scalar_select %p183, %s22, 0
        %s185 = smul.addr %s184, 8
        %s186 = scalar_lea.vmem %s1, %s185
        %p187 = pneg %p76
        %p188 = pneg %p73
        %s189 = smul.u32 8, %s22
        %p190 = scmp.lt.s32.totalorder %s189, 7
        %s191 = scalar_select %p190, %s189, 7
        %s192 = smul.addr %s191, 8
        %s193 = scalar_lea.vmem %s2, %s192
        %p194 = pneg %p102
        %p195 = pneg %p99
        %p196 = pneg %p128
        %p197 = pneg %p125
        %s198 = sand.u32 %s115, 1
        %s199 = scalar_lea.sflag [#allocation4], %s198
        %s200 = sand.u32 %s115, 1
        %s201 = smul.addr %s200, 8
        %s202 = scalar_lea.vmem [#allocation3], %s201
        %p203 = scmp.lt.s32.totalorder %s21, 1
        %s204 = scalar_select %p203, %s21, 1
        %s205 = smul.addr %s204, 8
        %s206 = scalar_lea.vmem %s0, %s205
        %p207 = scmp.lt.s32.totalorder %s22, 0
        %s208 = scalar_select %p207, %s22, 0
        %s209 = smul.addr %s208, 8
        %s210 = scalar_lea.vmem %s1, %s209
        %s211 = smul.u32 8, %s22
        %p212 = scmp.lt.s32.totalorder %s211, 7
        %s213 = scalar_select %p212, %s211, 7
        %s214 = smul.addr %s213, 8
        %s215 = scalar_lea.vmem %s2, %s214
        %s216 = smul.u32 8, %s22
        %p217 = scmp.eq.s32.totalorder %s22, 0
        // Predicated region
        $region33: #{tpu_custom_call.1} parent=31 // pred_check
          %p218 = pneg %p217
        $region34: #{tpu_custom_call.1} parent=31 // pred_check_branch
          %220 = sbr.rel (%p218) target = $region36
        $region35: #{tpu_custom_call.1} parent=31 // pred_region
          %vm221 = vcmask 261120
          %222 = vst.msk [vmem:[#allocation2] sm:$0xff] %vm221, 0.0
        $region36: #{tpu_custom_call.1} parent=31 // pred_fallthru
          _
        %v223 = vld [vmem:[%s206] sm:$0xff]
        %v224 = vld [vmem:[%s210] sm:$0xff]
        %v225 = vld [vmem:[%s210 + $0x8] sm:$0xff]
        %v226 = vld [vmem:[%s210 + $0x10] sm:$0xff]
        %v227 = vld [vmem:[%s210 + $0x18] sm:$0xff]
        %vm228 = vcmask 261120
        %v230 = vsel %vm228, %v223, 0
        %232 = vmatpush.msra.mxu0 0.0
        %233 = vmatpush.msra.mxu0 0.0
        %234 = vmatpush.msra.mxu0 0.0
        %235 = vmatpush.msra.mxu0 0.0
        %236 = vmatpush.msra.mxu0 0.0
        %237 = vmatpush.msra.mxu0 0.0
        %238 = vmatpush.msra.mxu0 0.0
        %239 = vmatpush.msra.mxu0 0.0
        %240 = vmatpush.msra.mxu0 0.0
        %241 = vmatpush.msra.mxu0 0.0
        %242 = vmatpush.msra.mxu0 0.0
        %243 = vmatpush.msra.mxu0 0.0
        %244 = vmatpush.msra.mxu0 %v227
        %245 = vmatpush.msra.mxu0 %v226
        %246 = vmatpush.msra.mxu0 %v225
        %247 = vmatpush.msra.mxu0 %v224
        %248 = vmatmul.f32.gmra.mxu0 %v230
        %v249 = vpop.f32.mrf.mxu0
        %v250 = vadd.f32 0.0, %v249
        %251 = vdwg.mxu0
        %v252 = vxor.u32 %v250, 2147483648
        %v253 = vmul.f32 %v252, 1.442695
        %v254 = vpow.pop %v253
        %v255 = vadd.f32 %v254, 1.0
        %v256 = vrcp.pop %v255
        %v257 = vmul.f32 %v255, %v256
        %v258 = vsub.f32 1.0, %v257
        %v259 = vmul.f32 %v256, %v258
        %v260 = vadd.f32 %v256, %v259
        %vm261 = vweird.f32 %v255
        %vm262 = vweird.f32 %v256
        %vm263 = vmor %vm261, %vm262
        %v264 = vsel %vm263, %v256, %v260
        %v265 = vand.u32 2147483647, %v255
        %vm266 = vcmp.eq.f32.partialorder %v265, 8.507059e+37
        %v267 = vand.u32 %v255, 2147483648
        %v268 = vor.u32 1.1754944e-38, %v267
        %v269 = vsel %vm266, %v268, %v264
        %v270 = vmul.f32 1.0, %v269
        %v271 = vmul.f32 %v250, %v270
        %273 = vrot.lane.b32.xlu0 %v250, 64
        %v274 = vpop.permute.xlu0 %273
        %v276 = vmul.f32 %v271, %v274
        %v277 = vld [vmem:[#allocation2] sm:$0xff]
        %v278 = vld [vmem:[%s215] sm:$0xff]
        %v279 = vld [vmem:[%s215 + $0x8] sm:$0xff]
        %v280 = vld [vmem:[%s215 + $0x10] sm:$0xff]
        %v281 = vld [vmem:[%s215 + $0x18] sm:$0xff]
        %v282 = vld [vmem:[%s215 + $0x20] sm:$0xff]
        %v283 = vld [vmem:[%s215 + $0x28] sm:$0xff]
        %v284 = vld [vmem:[%s215 + $0x30] sm:$0xff]
        %v285 = vld [vmem:[%s215 + $0x38] sm:$0xff]
        %vm286 = vcmask 523264
        %v288 = vsel %vm286, %v276, 0
        %290 = vmatpush.msra.mxu0 0.0
        %291 = vmatpush.msra.mxu0 0.0
        %292 = vmatpush.msra.mxu0 0.0
        %293 = vmatpush.msra.mxu0 0.0
        %294 = vmatpush.msra.mxu0 0.0
        %295 = vmatpush.msra.mxu0 0.0
        %296 = vmatpush.msra.mxu0 0.0
        %297 = vmatpush.msra.mxu0 0.0
        %298 = vmatpush.msra.mxu0 %v285
        %299 = vmatpush.msra.mxu0 %v284
        %300 = vmatpush.msra.mxu0 %v283
        %301 = vmatpush.msra.mxu0 %v282
        %302 = vmatpush.msra.mxu0 %v281
        %303 = vmatpush.msra.mxu0 %v280
        %304 = vmatpush.msra.mxu0 %v279
        %305 = vmatpush.msra.mxu0 %v278
        %306 = vmatmul.f32.gmra.mxu0 %v288
        %v307 = vpop.f32.mrf.mxu0
        %v308 = vadd.f32 0.0, %v307
        %309 = vdwg.mxu0
        %v310 = vadd.f32 %v277, %v308
        %311 = vst.msk [vmem:[#allocation2] sm:$0xff] %vm228, %v310
        // Predicated region
        $region37: #{tpu_custom_call.1} parent=31 // pred_check
          %p312 = pneg %p217
        $region38: #{tpu_custom_call.1} parent=31 // pred_check_branch
          %314 = sbr.rel (%p312) target = $region40
        $region39: #{tpu_custom_call.1} parent=31 // pred_region
          %v315 = vld [vmem:[#allocation2] sm:$0xff]
          %316 = vst.msk [vmem:[%s202] sm:$0xff] %vm228, %v315
        $region40: #{tpu_custom_call.1} parent=31 // pred_fallthru
          _
        %s317 = sand.u32 %s115, 1
        %s318 = scalar_lea.sflag [#allocation4], %s317
        %s319 = sand.u32 %s115, 1
        %s320 = smul.addr %s319, 8
        %s321 = scalar_lea.vmem [#allocation3], %s320
        // Predicated region
        $region41: #{tpu_custom_call.1} parent=31 // pred_check
          %p322 = pneg %p125
        $region42: #{tpu_custom_call.1} parent=31 // pred_check_branch
          %324 = sbr.rel (%p322) target = $region44
        $region43: #{tpu_custom_call.1} parent=31 // pred_region
          %326 = vsyncadd %s318, 0
          %s327 = smul.addr %s21, 8
          %s328 = scalar_lea.hbm %s3, %s327
          %s330 = sshll.u32 %s321, 4
          %s331 = int_to_ptr.vmem [resolvable:$true] %s330
          %s332 = sshll.u32 %s328, 4
          %s333 = int_to_ptr.hbm [resolvable:$true] %s332
          %335 = dma.vmem_to_hbm [thread:$0]  %s331, 128, %s333, %s318
        $region44: #{tpu_custom_call.1} parent=31 // pred_fallthru
          _
      $region32: #{tpu_custom_call.1} parent=5 // pred_fallthru
        _
      %p336 = scmp.le.s32.totalorder 2, %s12
      // Predicated region
      $region45: #{tpu_custom_call.1} parent=5 // pred_check
        %p337 = pneg %p336
      $region46: #{tpu_custom_call.1} parent=5 // pred_check_branch
        %339 = sbr.rel (%p337) target = $region48
      $region47: #{tpu_custom_call.1} parent=5 // pred_region
        %s340 = ssub.s32 %s12, 2
        // Predicated region
        $region49: #{tpu_custom_call.1} parent=47 // pred_check
          %p341 = pneg %p131
        $region50: #{tpu_custom_call.1} parent=47 // pred_check_branch
          %343 = sbr.rel (%p341) target = $region52
        $region51: #{tpu_custom_call.1} parent=47 // pred_region
          %s344 = sand.u32 %s116, 1
          %s345 = scalar_lea.sflag [#allocation4], %s344
          %s346 = sand.u32 %s116, 1
          %s347 = smul.addr %s346, 8
          %s348 = scalar_lea.vmem [#allocation3], %s347
          %350 = dma.done %s345, 128
        $region52: #{tpu_custom_call.1} parent=47 // pred_fallthru
          _
      $region48: #{tpu_custom_call.1} parent=5 // pred_fallthru
        _
    $region6: #{tpu_custom_call.1} parent=1 // loop_footer
      %s16 = sadd.s32 1, %s12
    $region7: #{tpu_custom_call.1} parent=1 // loop_footer_branch
      %11 = sbr.rel target = $region3
    $region8: #{tpu_custom_call.1} parent=1 // loop_exit
      _
    %351 = vsyncpa [#allocation4], 1
    %s352 = scalar_lea.sflag [#allocation4], 1
    %353 = vsyncpa %s352, 1

</llo_original>
